<compile_context>
chip_gen: v6e
topology: v6e:2x2x1
jax: 0.10.0
libtpu: 0.0.40
codegen_flags: <defaults>
</compile_context>

<pallas_src>
import functools

import jax
import jax.numpy as jnp
from jax.experimental import pallas as pl
from jax.experimental.pallas import tpu as pltpu


def _round_up(x, m):
    return ((x + m - 1) // m) * m


def _batcher_pairs(n):
    """Knuth merge-exchange (Batcher-style) sorting network for any n.

    Returns a list of comparator index pairs (i, j) with i < j; applying
    min/max to each pair in order sorts n keys ascending.  19 comparators
    for n = 8 (vs 28 for odd-even transposition)."""
    pairs = []
    if n < 2:
        return pairs
    t = (n - 1).bit_length()          # ceil(log2(n))
    p = 1 << (t - 1)
    while p > 0:
        q = 1 << (t - 1)
        r = 0
        dd = p
        while True:
            for i in range(n - dd):
                if (i & p) == r:
                    pairs.append((i, i + dd))
            if q == p:
                break
            dd = q - p
            q >>= 1
            r = p
        p >>= 1
    return pairs


def _check_network(n, pairs):
    """0-1 principle sanity check of the comparator network (tiny, one-time)."""
    for mask in range(1 << n):
        v = [(mask >> i) & 1 for i in range(n)]
        for i, k in pairs:
            if v[i] > v[k]:
                v[i], v[k] = v[k], v[i]
        assert all(v[i] <= v[i + 1] for i in range(n - 1)), "bad sort network"


def _embed_vec_sort_kernel(x_ref, a_ref, w_ref, out_ref, prod_ref, *,
                           n_rows, p, chunk, pairs):
    # x_ref   : [B_TILE, d*N]   flattened input block (row-major over (d, N))
    # a_ref   : [d*N, N*P]      block-diagonal-expanded A (padded to P lanes)
    # w_ref   : [1, N*P]        flattened, padded w
    # out_ref : [B_TILE, P]     lane-dense output block
    # prod_ref: [B_TILE, N*P]   VMEM scratch staging the matmul result
    #
    # Stage the MXU result once in VMEM: bounds the sort's live value set to
    # one sub-chunk instead of the whole tile (the spill fix).
    prod_ref[...] = jnp.dot(x_ref[...], a_ref[...],
                            preferred_element_type=jnp.float32)

    # Hoist the loop-invariant w slabs ([1, P] each) out of the inner loop.
    w_slabs = [w_ref[:, j * p:(j + 1) * p] for j in range(n_rows)]

    n_chunks = out_ref.shape[0] // chunk

    def body(c, carry):
        r0 = pl.multiple_of(c * chunk, chunk)
        # N groups of [chunk, P]: group j = prod[:, :, j] for this row chunk.
        rows = [prod_ref[pl.ds(r0, chunk), j * p:(j + 1) * p]
                for j in range(n_rows)]

        # Batcher/merge-exchange sorting network (ascending along the N axis);
        # purely elementwise min/max, vectorized over (rows, output lanes).
        for i, k in pairs:
            lo = jnp.minimum(rows[i], rows[k])
            hi = jnp.maximum(rows[i], rows[k])
            rows[i], rows[k] = lo, hi

        # out[b, o] = sum_j sorted[b, j, o] * w[0, j, o]  (balanced-tree FMA).
        terms = [rows[j] * w_slabs[j] for j in range(n_rows)]
        while len(terms) > 1:
            nxt = [terms[i] + terms[i + 1] for i in range(0, len(terms) - 1, 2)]
            if len(terms) % 2:
                nxt.append(terms[-1])
            terms = nxt
        out_ref[pl.ds(r0, chunk), :] = terms[0].astype(out_ref.dtype)
        return carry

    # fori_loop (not a Python for) so live ranges are actually capped per chunk.
    jax.lax.fori_loop(0, n_chunks, body, 0)


def make_embed_vec_sort_basic(A, w, d, n, *, b_tile=512, chunk=32, min_grid=1):
    """Prepare parameters once and return a jitted forward(x) -> [B, d_out].

    A: [d, d_out] f32, w: [1, N, d_out] f32 with N = max(n, d).
    `chunk` (<=32 recommended, multiple of 8) bounds the in-register working
    set of the sort; `min_grid=2` can be used on v7x to balance the 2 TCs."""
    assert chunk % 8 == 0 and chunk > 0
    d_out = A.shape[1]
    N = max(d, n)
    assert w.shape == (1, N, d_out), (w.shape, (1, N, d_out))

    # Pad d_out up to a multiple of 128 -> lane-dense tiles / unmasked stores.
    P = _round_up(d_out, 128)
    A_pad = jnp.zeros((d, P), jnp.float32).at[:, :d_out].set(A.astype(jnp.float32))
    w_pad = jnp.zeros((N, P), jnp.float32).at[:, :d_out].set(w[0].astype(jnp.float32))
    w_flat = w_pad.reshape(1, N * P)

    # One-time block-diagonal expansion of A (parameter prep, not per call):
    #   A_big[k*N + j, j2*P + o] = A_pad[k, o] * (j == j2)
    # so x.reshape(B, d*N) @ A_big gives prod in lane-flat [B, N*P] layout.
    eye = jnp.eye(N, dtype=jnp.float32)
    A_big = (A_pad[:, None, None, :] * eye[None, :, :, None]).reshape(d * N, N * P)

    pairs = tuple(_batcher_pairs(N))
    if N <= 12:
        _check_network(N, pairs)

    kernel = functools.partial(_embed_vec_sort_kernel,
                               n_rows=N, p=P, chunk=chunk, pairs=pairs)

    @jax.jit
    def forward(x):
        B = x.shape[0]
        if d > n:
            # PyTorch branch: input placed in the first n columns of zeros[B,d,d].
            pad = jnp.zeros((B, d, d - n), dtype=x.dtype)
            x = jnp.concatenate([x, pad], axis=2)
        # Free reshape (no transpose): x_flat[b, k*N + j] = x[b, k, j]
        x_flat = x.reshape(B, d * N).astype(jnp.float32)

        # Balanced batch tiling: minimize zero-row padding, keep B_TILE a
        # multiple of the inner chunk.
        tiles = max(pl.cdiv(B, b_tile), min_grid)
        B_TILE = _round_up(pl.cdiv(B, tiles), chunk)
        Bp = _round_up(B, B_TILE)
        if Bp != B:
            x_flat = jnp.pad(x_flat, ((0, Bp - B), (0, 0)))

        out = pl.pallas_call(
            kernel,
            out_shape=jax.ShapeDtypeStruct((Bp, P), jnp.float32),
            grid=(Bp // B_TILE,),
            in_specs=[
                pl.BlockSpec((B_TILE, d * N), lambda b: (b, 0)),
                pl.BlockSpec((d * N, N * P), lambda b: (0, 0)),
                pl.BlockSpec((1, N * P), lambda b: (0, 0)),
            ],
            out_specs=pl.BlockSpec((B_TILE, P), lambda b: (b, 0)),
            scratch_shapes=[pltpu.VMEM((B_TILE, N * P), jnp.float32)],
            compiler_params=pltpu.CompilerParams(
                dimension_semantics=("parallel",)),
        )(x_flat, A_big, w_flat)
        return out[:B, :d_out]                     # [B, d_out]

    return forward


def _reference_forward(x, A, w, d, n):
    """Pure-JAX re-implementation of the PyTorch forward for verification."""
    B = x.shape[0]
    if d > n:
        pad = jnp.zeros((B, d, d - n), dtype=x.dtype)
        x = jnp.concatenate([x, pad], axis=2)
    prod = jnp.einsum('bnd,do->bno', jnp.transpose(x, (0, 2, 1)), A)   # [B, N, d_out]
    prod = jnp.transpose(prod, (0, 2, 1))                              # [B, d_out, N]
    prod_sort = jnp.sort(prod, axis=2)
    out = jnp.sum(prod_sort * jnp.transpose(w, (0, 2, 1)), axis=2)     # [B, d_out]
    return out


if __name__ == "__main__":
    key = jax.random.PRNGKey(0)
    k_x, k_A, k_w, k_x2, k_x3, k_A3, k_w3 = jax.random.split(key, 7)

    # Case 1: d=3, n=8 (n >= d branch), small batch.  d_out = 2*d*n + 1 = 49.
    d, n, B = 3, 8, 2
    d_out = 2 * d * n + 1
    N = max(d, n)
    x = jax.random.normal(k_x, (B, d, n), dtype=jnp.float32)
    A = jax.random.normal(k_A, (d, d_out), dtype=jnp.float32)
    w = jax.random.normal(k_w, (1, N, d_out), dtype=jnp.float32)
    fwd = make_embed_vec_sort_basic(A, w, d, n)
    out = jax.block_until_ready(fwd(x))
    ref = _reference_forward(x, A, w, d, n)
    assert out.shape == (B, d_out)
    assert jnp.allclose(out, ref, atol=1e-4, rtol=1e-4), (out, ref)

    # Case 2: larger batch -> grid > 1, balanced tiles + batch padding.
    B2 = 1000
    x2 = jax.random.normal(k_x2, (B2, d, n), dtype=jnp.float32)
    out2 = jax.block_until_ready(fwd(x2))
    ref2 = _reference_forward(x2, A, w, d, n)
    assert out2.shape == (B2, d_out)
    assert jnp.allclose(out2, ref2, atol=1e-4, rtol=1e-4)

    # Case 3: d > n branch (input zero-padded to [B, d, d] inside forward).
    d3, n3, B3 = 8, 3, 5
    d_out3 = 2 * d3 * n3 + 1
    N3 = max(d3, n3)
    x3 = jax.random.normal(k_x3, (B3, d3, n3), dtype=jnp.float32)
    A3 = jax.random.normal(k_A3, (d3, d_out3), dtype=jnp.float32)
    w3 = jax.random.normal(k_w3, (1, N3, d_out3), dtype=jnp.float32)
    fwd3 = make_embed_vec_sort_basic(A3, w3, d3, n3)
    out3 = jax.block_until_ready(fwd3(x3))
    ref3 = _reference_forward(x3, A3, w3, d3, n3)
    assert out3.shape == (B3, d_out3)
    assert jnp.allclose(out3, ref3, atol=1e-4, rtol=1e-4)

    print("KERNEL_OK")
</pallas_src>

<mosaic_0001>
module attributes {stable_mosaic.version = 11 : i64} {
  func.func @_embed_vec_sort_kernel(%arg0: i32, %arg1: memref<32x24xf32, #tpu.memory_space<vmem>>, %arg2: memref<24x1024xf32, #tpu.memory_space<vmem>>, %arg3: memref<1x1024xf32, #tpu.memory_space<vmem>>, %arg4: memref<32x128xf32, #tpu.memory_space<vmem>>, %arg5: memref<32x1024xf32, #tpu.memory_space<vmem>>) attributes {dimension_semantics = [#tpu.dimension_semantics<parallel>], iteration_bounds = array<i64: 1>, scalar_prefetch = 0 : i64, scratch_operands = 1 : i64, tpu.core_type = #tpu.core_type<tc>, window_params = [{transform_indices = @transform_0, window_bounds = array<i64: 32, 24>}, {pipeline_mode = #tpu.pipeline_mode<synchronous>, transform_indices = @transform_1, window_bounds = array<i64: 24, 1024>}, {pipeline_mode = #tpu.pipeline_mode<synchronous>, transform_indices = @transform_2, window_bounds = array<i64: 1, 1024>}, {transform_indices = @transform_3, window_bounds = array<i64: 32, 128>}]} {
    %c0 = arith.constant 0 : index
    %c0_0 = arith.constant 0 : index
    %0 = vector.load %arg1[%c0, %c0_0] : memref<32x24xf32, #tpu.memory_space<vmem>>, vector<32x24xf32>
    %c0_1 = arith.constant 0 : index
    %c0_2 = arith.constant 0 : index
    %1 = vector.load %arg2[%c0_1, %c0_2] : memref<24x1024xf32, #tpu.memory_space<vmem>>, vector<24x1024xf32>
    %cst = arith.constant dense<0.000000e+00> : vector<32x1024xf32>
    %2 = tpu.matmul %0, %1, %cst {dimension_numbers = #tpu.dot_dimension_numbers<[1], [0], [0], [1], [0, 0, 1, 1], [], []>} : vector<32x24xf32>, vector<24x1024xf32>, vector<32x1024xf32> -> vector<32x1024xf32>
    %c0_3 = arith.constant 0 : index
    %c0_4 = arith.constant 0 : index
    %3 = vector.load %arg5[%c0_3, %c0_4] : memref<32x1024xf32, #tpu.memory_space<vmem>>, vector<32x1024xf32>
    tpu.vector_store %arg5[%c0_3, %c0_4], %2 {strides = array<i32>} : memref<32x1024xf32, #tpu.memory_space<vmem>>, vector<32x1024xf32>,
    %c0_5 = arith.constant 0 : index
    %c0_6 = arith.constant 0 : index
    %4 = vector.load %arg3[%c0_5, %c0_6] : memref<1x1024xf32, #tpu.memory_space<vmem>>, vector<1x128xf32>
    %c0_7 = arith.constant 0 : index
    %c128 = arith.constant 128 : index
    %5 = vector.load %arg3[%c0_7, %c128] : memref<1x1024xf32, #tpu.memory_space<vmem>>, vector<1x128xf32>
    %c0_8 = arith.constant 0 : index
    %c256 = arith.constant 256 : index
    %6 = vector.load %arg3[%c0_8, %c256] : memref<1x1024xf32, #tpu.memory_space<vmem>>, vector<1x128xf32>
    %c0_9 = arith.constant 0 : index
    %c384 = arith.constant 384 : index
    %7 = vector.load %arg3[%c0_9, %c384] : memref<1x1024xf32, #tpu.memory_space<vmem>>, vector<1x128xf32>
    %c0_10 = arith.constant 0 : index
    %c512 = arith.constant 512 : index
    %8 = vector.load %arg3[%c0_10, %c512] : memref<1x1024xf32, #tpu.memory_space<vmem>>, vector<1x128xf32>
    %c0_11 = arith.constant 0 : index
    %c640 = arith.constant 640 : index
    %9 = vector.load %arg3[%c0_11, %c640] : memref<1x1024xf32, #tpu.memory_space<vmem>>, vector<1x128xf32>
    %c0_12 = arith.constant 0 : index
    %c768 = arith.constant 768 : index
    %10 = vector.load %arg3[%c0_12, %c768] : memref<1x1024xf32, #tpu.memory_space<vmem>>, vector<1x128xf32>
    %c0_13 = arith.constant 0 : index
    %c896 = arith.constant 896 : index
    %11 = vector.load %arg3[%c0_13, %c896] : memref<1x1024xf32, #tpu.memory_space<vmem>>, vector<1x128xf32>
    %c0_i32 = arith.constant 0 : i32
    %c32_i32 = arith.constant 32 : i32
    %12 = arith.muli %c0_i32, %c32_i32 : i32
    %13 = tpu.assume_multiple %12, 32 : i32
    %14 = arith.index_cast %13 : i32 to index
    %c0_14 = arith.constant 0 : index
    %15 = vector.load %arg5[%14, %c0_14] : memref<32x1024xf32, #tpu.memory_space<vmem>>, vector<32x128xf32>
    %16 = arith.index_cast %13 : i32 to index
    %c128_15 = arith.constant 128 : index
    %17 = vector.load %arg5[%16, %c128_15] : memref<32x1024xf32, #tpu.memory_space<vmem>>, vector<32x128xf32>
    %18 = arith.index_cast %13 : i32 to index
    %c256_16 = arith.constant 256 : index
    %19 = vector.load %arg5[%18, %c256_16] : memref<32x1024xf32, #tpu.memory_space<vmem>>, vector<32x128xf32>
    %20 = arith.index_cast %13 : i32 to index
    %c384_17 = arith.constant 384 : index
    %21 = vector.load %arg5[%20, %c384_17] : memref<32x1024xf32, #tpu.memory_space<vmem>>, vector<32x128xf32>
    %22 = arith.index_cast %13 : i32 to index
    %c512_18 = arith.constant 512 : index
    %23 = vector.load %arg5[%22, %c512_18] : memref<32x1024xf32, #tpu.memory_space<vmem>>, vector<32x128xf32>
    %24 = arith.index_cast %13 : i32 to index
    %c640_19 = arith.constant 640 : index
    %25 = vector.load %arg5[%24, %c640_19] : memref<32x1024xf32, #tpu.memory_space<vmem>>, vector<32x128xf32>
    %26 = arith.index_cast %13 : i32 to index
    %c768_20 = arith.constant 768 : index
    %27 = vector.load %arg5[%26, %c768_20] : memref<32x1024xf32, #tpu.memory_space<vmem>>, vector<32x128xf32>
    %28 = arith.index_cast %13 : i32 to index
    %c896_21 = arith.constant 896 : index
    %29 = vector.load %arg5[%28, %c896_21] : memref<32x1024xf32, #tpu.memory_space<vmem>>, vector<32x128xf32>
    %30 = arith.minimumf %15, %23 : vector<32x128xf32>
    %31 = arith.maximumf %15, %23 : vector<32x128xf32>
    %32 = arith.minimumf %17, %25 : vector<32x128xf32>
    %33 = arith.maximumf %17, %25 : vector<32x128xf32>
    %34 = arith.minimumf %19, %27 : vector<32x128xf32>
    %35 = arith.maximumf %19, %27 : vector<32x128xf32>
    %36 = arith.minimumf %21, %29 : vector<32x128xf32>
    %37 = arith.maximumf %21, %29 : vector<32x128xf32>
    %38 = arith.minimumf %30, %34 : vector<32x128xf32>
    %39 = arith.maximumf %30, %34 : vector<32x128xf32>
    %40 = arith.minimumf %32, %36 : vector<32x128xf32>
    %41 = arith.maximumf %32, %36 : vector<32x128xf32>
    %42 = arith.minimumf %31, %35 : vector<32x128xf32>
    %43 = arith.maximumf %31, %35 : vector<32x128xf32>
    %44 = arith.minimumf %33, %37 : vector<32x128xf32>
    %45 = arith.maximumf %33, %37 : vector<32x128xf32>
    %46 = arith.minimumf %39, %42 : vector<32x128xf32>
    %47 = arith.maximumf %39, %42 : vector<32x128xf32>
    %48 = arith.minimumf %41, %44 : vector<32x128xf32>
    %49 = arith.maximumf %41, %44 : vector<32x128xf32>
    %50 = arith.minimumf %38, %40 : vector<32x128xf32>
    %51 = arith.maximumf %38, %40 : vector<32x128xf32>
    %52 = arith.minimumf %46, %48 : vector<32x128xf32>
    %53 = arith.maximumf %46, %48 : vector<32x128xf32>
    %54 = arith.minimumf %47, %49 : vector<32x128xf32>
    %55 = arith.maximumf %47, %49 : vector<32x128xf32>
    %56 = arith.minimumf %43, %45 : vector<32x128xf32>
    %57 = arith.maximumf %43, %45 : vector<32x128xf32>
    %58 = arith.minimumf %51, %54 : vector<32x128xf32>
    %59 = arith.maximumf %51, %54 : vector<32x128xf32>
    %60 = arith.minimumf %53, %56 : vector<32x128xf32>
    %61 = arith.maximumf %53, %56 : vector<32x128xf32>
    %62 = arith.minimumf %58, %52 : vector<32x128xf32>
    %63 = arith.maximumf %58, %52 : vector<32x128xf32>
    %64 = arith.minimumf %60, %59 : vector<32x128xf32>
    %65 = arith.maximumf %60, %59 : vector<32x128xf32>
    %66 = arith.minimumf %55, %61 : vector<32x128xf32>
    %67 = arith.maximumf %55, %61 : vector<32x128xf32>
    %68 = vector.broadcast %4 : vector<1x128xf32> to vector<32x128xf32>
    %69 = arith.mulf %50, %68 : vector<32x128xf32>
    %70 = vector.broadcast %5 : vector<1x128xf32> to vector<32x128xf32>
    %71 = arith.mulf %62, %70 : vector<32x128xf32>
    %72 = vector.broadcast %6 : vector<1x128xf32> to vector<32x128xf32>
    %73 = arith.mulf %63, %72 : vector<32x128xf32>
    %74 = vector.broadcast %7 : vector<1x128xf32> to vector<32x128xf32>
    %75 = arith.mulf %64, %74 : vector<32x128xf32>
    %76 = vector.broadcast %8 : vector<1x128xf32> to vector<32x128xf32>
    %77 = arith.mulf %65, %76 : vector<32x128xf32>
    %78 = vector.broadcast %9 : vector<1x128xf32> to vector<32x128xf32>
    %79 = arith.mulf %66, %78 : vector<32x128xf32>
    %80 = vector.broadcast %10 : vector<1x128xf32> to vector<32x128xf32>
    %81 = arith.mulf %67, %80 : vector<32x128xf32>
    %82 = vector.broadcast %11 : vector<1x128xf32> to vector<32x128xf32>
    %83 = arith.mulf %57, %82 : vector<32x128xf32>
    %84 = arith.addf %69, %71 : vector<32x128xf32>
    %85 = arith.addf %73, %75 : vector<32x128xf32>
    %86 = arith.addf %77, %79 : vector<32x128xf32>
    %87 = arith.addf %81, %83 : vector<32x128xf32>
    %88 = arith.addf %84, %85 : vector<32x128xf32>
    %89 = arith.addf %86, %87 : vector<32x128xf32>
    %90 = arith.addf %88, %89 : vector<32x128xf32>
    %91 = arith.index_cast %13 : i32 to index
    %c0_22 = arith.constant 0 : index
    %92 = vector.load %arg4[%91, %c0_22] : memref<32x128xf32, #tpu.memory_space<vmem>>, vector<32x128xf32>
    tpu.vector_store %arg4[%91, %c0_22], %90 {strides = array<i32>} : memref<32x128xf32, #tpu.memory_space<vmem>>, vector<32x128xf32>,
    %c1_i32 = arith.constant 1 : i32
    return
  }
  func.func @transform_0(%arg0: i32) -> (i32, i32) {
    %c0_i32 = arith.constant 0 : i32
    %c0_i32_0 = arith.constant 0 : i32
    return %arg0, %c0_i32 : i32, i32
  }
  func.func @transform_1(%arg0: i32) -> (i32, i32) {
    %c0_i32 = arith.constant 0 : i32
    %c0_i32_0 = arith.constant 0 : i32
    %c0_i32_1 = arith.constant 0 : i32
    return %c0_i32, %c0_i32_0 : i32, i32
  }
  func.func @transform_2(%arg0: i32) -> (i32, i32) {
    %c0_i32 = arith.constant 0 : i32
    %c0_i32_0 = arith.constant 0 : i32
    %c0_i32_1 = arith.constant 0 : i32
    return %c0_i32, %c0_i32_0 : i32, i32
  }
  func.func @transform_3(%arg0: i32) -> (i32, i32) {
    %c0_i32 = arith.constant 0 : i32
    %c0_i32_0 = arith.constant 0 : i32
    return %arg0, %c0_i32 : i32, i32
  }
}

</mosaic_0001>

<llo_original>
// kernel: forward.1
$region0: #{forward.1}
  #allocation0 [shape = 'u32[]', space=smem, size = 0x4, offset = 0x4, fixed_abs, tag = 'smem constant byte address 0x4 - core index']
  #allocation1 [shape = 'u32[144,128]{1,0:T(1,128)}', space=vmem, size = 0x12000, scoped, tag = 'internal scratch']
  #allocation2 [shape = 'f32[32,1024]{1,0:T(8,128)}', space=vmem, size = 0x20000, scoped, tag = 'scratch operand']
  %s0 = inlined_call_operand.vmem [shape: f32[32,24], index: 0, kind: input, shape index: {}]
  %s1 = inlined_call_operand.hbm [shape: f32[24,1024], index: 1, kind: input, shape index: {}]
  %s2 = inlined_call_operand.vmem [shape: f32[1,1024], index: 2, kind: input, shape index: {}]
  %s3 = inlined_call_operand.vmem [shape: f32[32,128], index: 3, kind: output, shape index: {}]
  %s4 = sld [smem:[#allocation0]]
  $region26: #{forward.1} parent=0
    _
  %s6 = ssub.s32 1, %s4
  %s7 = scalar_select 0, %s6, %s4
  $region1: #{forward.1} parent=0
    #allocation3 [shape = 'u8[98304]{0}', space=vmem, size = 0x18000, scoped, tag = 'input window, operand 1, single buffered']
    #allocation4 [shape = 's32[1]{0}', space=sflag, size = 0x4, scoped, tag = 'scoped memory for forward.1']
    %8 = vsyncpa [#allocation4], 0
    // Predicated region
    $region2: #{forward.1} parent=1 // pred_check
      _
    $region3: #{forward.1} parent=1 // pred_check_branch
      %10 = sbr.rel (0) target = $region5
    $region4: #{forward.1} parent=1 // pred_region
      _
    $region5: #{forward.1} parent=1 // pred_fallthru
      _
    // Predicated region
    $region6: #{forward.1} parent=1 // pred_check
      _
    $region7: #{forward.1} parent=1 // pred_check_branch
      %12 = sbr.rel (0) target = $region9
    $region8: #{forward.1} parent=1 // pred_region
      %s14 = ssub.s32 3072, 3072
      %15 = vsyncadd [#allocation4], %s14
      %s16 = sshll.u32 [#allocation3], 4
      %s17 = int_to_ptr.vmem [resolvable:$true] %s16
      %22 = dma.hbm_to_vmem [thread:$0]  %s1, 3072, %s17, [#allocation4], 1024, 1024, 64
    $region9: #{forward.1} parent=1 // pred_fallthru
      _
    // Predicated region
    $region10: #{forward.1} parent=1 // pred_check
      _
    $region11: #{forward.1} parent=1 // pred_check_branch
      %24 = sbr.rel (0) target = $region13
    $region12: #{forward.1} parent=1 // pred_region
      _
    $region13: #{forward.1} parent=1 // pred_fallthru
      _
    // Predicated region
    $region14: #{forward.1} parent=1 // pred_check
      _
    $region15: #{forward.1} parent=1 // pred_check_branch
      %26 = sbr.rel (0) target = $region17
    $region16: #{forward.1} parent=1 // pred_region
      %27 = dma.done [#allocation4], 3072
    $region17: #{forward.1} parent=1 // pred_fallthru
      _
    %v28 = vld [vmem:[%s0] sm:$0xff]
    %v29 = vld [vmem:[%s0 + $0x8] sm:$0xff]
    %v30 = vld [vmem:[%s0 + $0x10] sm:$0xff]
    %v31 = vld [vmem:[%s0 + $0x18] sm:$0xff]
    %v32 = vld [vmem:[#allocation3] sm:$0xff]
    %v33 = vld [vmem:[#allocation3 + $0x8] sm:$0xff]
    %v34 = vld [vmem:[#allocation3 + $0x10] sm:$0xff]
    %v35 = vld [vmem:[#allocation3 + $0x18] sm:$0xff]
    %v36 = vld [vmem:[#allocation3 + $0x20] sm:$0xff]
    %v37 = vld [vmem:[#allocation3 + $0x28] sm:$0xff]
    %v38 = vld [vmem:[#allocation3 + $0x30] sm:$0xff]
    %v39 = vld [vmem:[#allocation3 + $0x38] sm:$0xff]
    %v40 = vld [vmem:[#allocation3 + $0x40] sm:$0xff]
    %v41 = vld [vmem:[#allocation3 + $0x48] sm:$0xff]
    %v42 = vld [vmem:[#allocation3 + $0x50] sm:$0xff]
    %v43 = vld [vmem:[#allocation3 + $0x58] sm:$0xff]
    %v44 = vld [vmem:[#allocation3 + $0x60] sm:$0xff]
    %v45 = vld [vmem:[#allocation3 + $0x68] sm:$0xff]
    %v46 = vld [vmem:[#allocation3 + $0x70] sm:$0xff]
    %v47 = vld [vmem:[#allocation3 + $0x78] sm:$0xff]
    %v48 = vld [vmem:[#allocation3 + $0x80] sm:$0xff]
    %v49 = vld [vmem:[#allocation3 + $0x88] sm:$0xff]
    %v50 = vld [vmem:[#allocation3 + $0x90] sm:$0xff]
    %v51 = vld [vmem:[#allocation3 + $0x98] sm:$0xff]
    %v52 = vld [vmem:[#allocation3 + $0xa0] sm:$0xff]
    %v53 = vld [vmem:[#allocation3 + $0xa8] sm:$0xff]
    %v54 = vld [vmem:[#allocation3 + $0xb0] sm:$0xff]
    %v55 = vld [vmem:[#allocation3 + $0xb8] sm:$0xff]
    %vm56 = vcmask 195584
    %v58 = vsel %vm56, %v28, 0
    %v61 = vsel %vm56, %v29, 0
    %v64 = vsel %vm56, %v30, 0
    %v67 = vsel %vm56, %v31, 0
    %69 = vmatprep.subr.mxu0 0.0
    %70 = vmatpush1.msra.mxu0 0.0
    %71 = vmatprep.subr.mxu0 0.0
    %72 = vmatpush1.msra.mxu0 0.0
    %73 = vmatprep.subr.mxu0 0.0
    %74 = vmatpush1.msra.mxu0 0.0
    %75 = vmatprep.subr.mxu0 0.0
    %76 = vmatpush1.msra.mxu0 0.0
    %77 = vmatprep.subr.mxu0 0.0
    %78 = vmatpush1.msra.mxu0 0.0
    %79 = vmatprep.subr.mxu0 0.0
    %80 = vmatpush1.msra.mxu0 0.0
    %81 = vmatprep.subr.mxu0 0.0
    %82 = vmatpush1.msra.mxu0 0.0
    %83 = vmatprep.subr.mxu0 0.0
    %84 = vmatpush1.msra.mxu0 0.0
    %85 = vmatprep.subr.mxu0 0.0
    %86 = vmatpush1.msra.mxu0 0.0
    %87 = vmatprep.subr.mxu0 0.0
    %88 = vmatpush1.msra.mxu0 0.0
    %89 = vmatprep.subr.mxu0 0.0
    %90 = vmatpush1.msra.mxu0 0.0
    %91 = vmatprep.subr.mxu0 0.0
    %92 = vmatpush1.msra.mxu0 0.0
    %93 = vmatprep.subr.mxu0 0.0
    %94 = vmatpush1.msra.mxu0 0.0
    %95 = vmatprep.subr.mxu0 %v49
    %96 = vmatpush1.msra.mxu0 %v48
    %97 = vmatprep.subr.mxu0 %v41
    %98 = vmatpush1.msra.mxu0 %v40
    %99 = vmatprep.subr.mxu0 %v33
    %100 = vmatpush1.msra.mxu0 %v32
    %101 = vmatprep.subr.mxu0 0.0
    %102 = vmatpush2.msra.mxu0 0.0
    %103 = vmatprep.subr.mxu0 0.0
    %104 = vmatpush2.msra.mxu0 0.0
    %105 = vmatprep.subr.mxu0 0.0
    %106 = vmatpush2.msra.mxu0 0.0
    %107 = vmatprep.subr.mxu0 0.0
    %108 = vmatpush2.msra.mxu0 0.0
    %109 = vmatprep.subr.mxu0 0.0
    %110 = vmatpush2.msra.mxu0 0.0
    %111 = vmatprep.subr.mxu0 0.0
    %112 = vmatpush2.msra.mxu0 0.0
    %113 = vmatprep.subr.mxu0 0.0
    %114 = vmatpush2.msra.mxu0 0.0
    %115 = vmatprep.subr.mxu0 0.0
    %116 = vmatpush2.msra.mxu0 0.0
    %117 = vmatprep.subr.mxu0 0.0
    %118 = vmatpush2.msra.mxu0 0.0
    %119 = vmatprep.subr.mxu0 0.0
    %120 = vmatpush2.msra.mxu0 0.0
    %121 = vmatprep.subr.mxu0 0.0
    %122 = vmatpush2.msra.mxu0 0.0
    %123 = vmatprep.subr.mxu0 0.0
    %124 = vmatpush2.msra.mxu0 0.0
    %125 = vmatprep.subr.mxu0 0.0
    %126 = vmatpush2.msra.mxu0 0.0
    %127 = vmatprep.subr.mxu0 0.0
    %128 = vmatpush2.msra.mxu0 0.0
    %129 = vmatprep.subr.mxu0 0.0
    %130 = vmatpush2.msra.mxu0 0.0
    %131 = vmatprep.subr.mxu0 0.0
    %132 = vmatpush2.msra.mxu0 0.0
    %133 = vmatprep.mubr.f32.mxu0 0.0
    %134 = vmatmul.mubr.f32.gmra.mxu0 %v58
    %v135 = vpop.f32.mrf.mxu0
    %v136 = vadd.f32 0.0, %v135
    %v137 = vpop.f32.mrf.mxu0
    %v138 = vadd.f32 0.0, %v137
    %139 = vmatprep.mubr.f32.mxu0 0.0
    %140 = vmatmul.mubr.f32.gmra.mxu0 %v61
    %v141 = vpop.f32.mrf.mxu0
    %v142 = vadd.f32 0.0, %v141
    %v143 = vpop.f32.mrf.mxu0
    %v144 = vadd.f32 0.0, %v143
    %145 = vmatprep.mubr.f32.mxu0 0.0
    %146 = vmatmul.mubr.f32.gmra.mxu0 %v64
    %v147 = vpop.f32.mrf.mxu0
    %v148 = vadd.f32 0.0, %v147
    %v149 = vpop.f32.mrf.mxu0
    %v150 = vadd.f32 0.0, %v149
    %151 = vmatprep.mubr.f32.mxu0 0.0
    %152 = vmatmul.mubr.f32.gmra.mxu0 %v67
    %v153 = vpop.f32.mrf.mxu0
    %v154 = vadd.f32 0.0, %v153
    %v155 = vpop.f32.mrf.mxu0
    %v156 = vadd.f32 0.0, %v155
    %157 = vdwg.mxu0
    %158 = vmatprep.subr.mxu0 0.0
    %159 = vmatpush1.msra.mxu0 0.0
    %160 = vmatprep.subr.mxu0 0.0
    %161 = vmatpush1.msra.mxu0 0.0
    %162 = vmatprep.subr.mxu0 0.0
    %163 = vmatpush1.msra.mxu0 0.0
    %164 = vmatprep.subr.mxu0 0.0
    %165 = vmatpush1.msra.mxu0 0.0
    %166 = vmatprep.subr.mxu0 0.0
    %167 = vmatpush1.msra.mxu0 0.0
    %168 = vmatprep.subr.mxu0 0.0
    %169 = vmatpush1.msra.mxu0 0.0
    %170 = vmatprep.subr.mxu0 0.0
    %171 = vmatpush1.msra.mxu0 0.0
    %172 = vmatprep.subr.mxu0 0.0
    %173 = vmatpush1.msra.mxu0 0.0
    %174 = vmatprep.subr.mxu0 0.0
    %175 = vmatpush1.msra.mxu0 0.0
    %176 = vmatprep.subr.mxu0 0.0
    %177 = vmatpush1.msra.mxu0 0.0
    %178 = vmatprep.subr.mxu0 0.0
    %179 = vmatpush1.msra.mxu0 0.0
    %180 = vmatprep.subr.mxu0 0.0
    %181 = vmatpush1.msra.mxu0 0.0
    %182 = vmatprep.subr.mxu0 0.0
    %183 = vmatpush1.msra.mxu0 0.0
    %184 = vmatprep.subr.mxu0 %v51
    %185 = vmatpush1.msra.mxu0 %v50
    %186 = vmatprep.subr.mxu0 %v43
    %187 = vmatpush1.msra.mxu0 %v42
    %188 = vmatprep.subr.mxu0 %v35
    %189 = vmatpush1.msra.mxu0 %v34
    %190 = vmatprep.subr.mxu0 0.0
    %191 = vmatpush2.msra.mxu0 0.0
    %192 = vmatprep.subr.mxu0 0.0
    %193 = vmatpush2.msra.mxu0 0.0
    %194 = vmatprep.subr.mxu0 0.0
    %195 = vmatpush2.msra.mxu0 0.0
    %196 = vmatprep.subr.mxu0 0.0
    %197 = vmatpush2.msra.mxu0 0.0
    %198 = vmatprep.subr.mxu0 0.0
    %199 = vmatpush2.msra.mxu0 0.0
    %200 = vmatprep.subr.mxu0 0.0
    %201 = vmatpush2.msra.mxu0 0.0
    %202 = vmatprep.subr.mxu0 0.0
    %203 = vmatpush2.msra.mxu0 0.0
    %204 = vmatprep.subr.mxu0 0.0
    %205 = vmatpush2.msra.mxu0 0.0
    %206 = vmatprep.subr.mxu0 0.0
    %207 = vmatpush2.msra.mxu0 0.0
    %208 = vmatprep.subr.mxu0 0.0
    %209 = vmatpush2.msra.mxu0 0.0
    %210 = vmatprep.subr.mxu0 0.0
    %211 = vmatpush2.msra.mxu0 0.0
    %212 = vmatprep.subr.mxu0 0.0
    %213 = vmatpush2.msra.mxu0 0.0
    %214 = vmatprep.subr.mxu0 0.0
    %215 = vmatpush2.msra.mxu0 0.0
    %216 = vmatprep.subr.mxu0 0.0
    %217 = vmatpush2.msra.mxu0 0.0
    %218 = vmatprep.subr.mxu0 0.0
    %219 = vmatpush2.msra.mxu0 0.0
    %220 = vmatprep.subr.mxu0 0.0
    %221 = vmatpush2.msra.mxu0 0.0
    %222 = vmatprep.mubr.f32.mxu0 0.0
    %223 = vmatmul.mubr.f32.gmra.mxu0 %v58
    %v224 = vpop.f32.mrf.mxu0
    %v225 = vadd.f32 0.0, %v224
    %v226 = vpop.f32.mrf.mxu0
    %v227 = vadd.f32 0.0, %v226
    %228 = vmatprep.mubr.f32.mxu0 0.0
    %229 = vmatmul.mubr.f32.gmra.mxu0 %v61
    %v230 = vpop.f32.mrf.mxu0
    %v231 = vadd.f32 0.0, %v230
    %v232 = vpop.f32.mrf.mxu0
    %v233 = vadd.f32 0.0, %v232
    %234 = vmatprep.mubr.f32.mxu0 0.0
    %235 = vmatmul.mubr.f32.gmra.mxu0 %v64
    %v236 = vpop.f32.mrf.mxu0
    %v237 = vadd.f32 0.0, %v236
    %v238 = vpop.f32.mrf.mxu0
    %v239 = vadd.f32 0.0, %v238
    %240 = vmatprep.mubr.f32.mxu0 0.0
    %241 = vmatmul.mubr.f32.gmra.mxu0 %v67
    %v242 = vpop.f32.mrf.mxu0
    %v243 = vadd.f32 0.0, %v242
    %v244 = vpop.f32.mrf.mxu0
    %v245 = vadd.f32 0.0, %v244
    %246 = vdwg.mxu0
    %247 = vmatprep.subr.mxu0 0.0
    %248 = vmatpush1.msra.mxu0 0.0
    %249 = vmatprep.subr.mxu0 0.0
    %250 = vmatpush1.msra.mxu0 0.0
    %251 = vmatprep.subr.mxu0 0.0
    %252 = vmatpush1.msra.mxu0 0.0
    %253 = vmatprep.subr.mxu0 0.0
    %254 = vmatpush1.msra.mxu0 0.0
    %255 = vmatprep.subr.mxu0 0.0
    %256 = vmatpush1.msra.mxu0 0.0
    %257 = vmatprep.subr.mxu0 0.0
    %258 = vmatpush1.msra.mxu0 0.0
    %259 = vmatprep.subr.mxu0 0.0
    %260 = vmatpush1.msra.mxu0 0.0
    %261 = vmatprep.subr.mxu0 0.0
    %262 = vmatpush1.msra.mxu0 0.0
    %263 = vmatprep.subr.mxu0 0.0
    %264 = vmatpush1.msra.mxu0 0.0
    %265 = vmatprep.subr.mxu0 0.0
    %266 = vmatpush1.msra.mxu0 0.0
    %267 = vmatprep.subr.mxu0 0.0
    %268 = vmatpush1.msra.mxu0 0.0
    %269 = vmatprep.subr.mxu0 0.0
    %270 = vmatpush1.msra.mxu0 0.0
    %271 = vmatprep.subr.mxu0 0.0
    %272 = vmatpush1.msra.mxu0 0.0
    %273 = vmatprep.subr.mxu0 %v53
    %274 = vmatpush1.msra.mxu0 %v52
    %275 = vmatprep.subr.mxu0 %v45
    %276 = vmatpush1.msra.mxu0 %v44
    %277 = vmatprep.subr.mxu0 %v37
    %278 = vmatpush1.msra.mxu0 %v36
    %279 = vmatprep.subr.mxu0 0.0
    %280 = vmatpush2.msra.mxu0 0.0
    %281 = vmatprep.subr.mxu0 0.0
    %282 = vmatpush2.msra.mxu0 0.0
    %283 = vmatprep.subr.mxu0 0.0
    %284 = vmatpush2.msra.mxu0 0.0
    %285 = vmatprep.subr.mxu0 0.0
    %286 = vmatpush2.msra.mxu0 0.0
    %287 = vmatprep.subr.mxu0 0.0
    %288 = vmatpush2.msra.mxu0 0.0
    %289 = vmatprep.subr.mxu0 0.0
    %290 = vmatpush2.msra.mxu0 0.0
    %291 = vmatprep.subr.mxu0 0.0
    %292 = vmatpush2.msra.mxu0 0.0
    %293 = vmatprep.subr.mxu0 0.0
    %294 = vmatpush2.msra.mxu0 0.0
    %295 = vmatprep.subr.mxu0 0.0
    %296 = vmatpush2.msra.mxu0 0.0
    %297 = vmatprep.subr.mxu0 0.0
    %298 = vmatpush2.msra.mxu0 0.0
    %299 = vmatprep.subr.mxu0 0.0
    %300 = vmatpush2.msra.mxu0 0.0
    %301 = vmatprep.subr.mxu0 0.0
    %302 = vmatpush2.msra.mxu0 0.0
    %303 = vmatprep.subr.mxu0 0.0
    %304 = vmatpush2.msra.mxu0 0.0
    %305 = vmatprep.subr.mxu0 0.0
    %306 = vmatpush2.msra.mxu0 0.0
    %307 = vmatprep.subr.mxu0 0.0
    %308 = vmatpush2.msra.mxu0 0.0
    %309 = vmatprep.subr.mxu0 0.0
    %310 = vmatpush2.msra.mxu0 0.0
    %311 = vmatprep.mubr.f32.mxu0 0.0
    %312 = vmatmul.mubr.f32.gmra.mxu0 %v58
    %v313 = vpop.f32.mrf.mxu0
    %v314 = vadd.f32 0.0, %v313
    %v315 = vpop.f32.mrf.mxu0
    %v316 = vadd.f32 0.0, %v315
    %317 = vmatprep.mubr.f32.mxu0 0.0
    %318 = vmatmul.mubr.f32.gmra.mxu0 %v61
    %v319 = vpop.f32.mrf.mxu0
    %v320 = vadd.f32 0.0, %v319
    %v321 = vpop.f32.mrf.mxu0
    %v322 = vadd.f32 0.0, %v321
    %323 = vmatprep.mubr.f32.mxu0 0.0
    %324 = vmatmul.mubr.f32.gmra.mxu0 %v64
    %v325 = vpop.f32.mrf.mxu0
    %v326 = vadd.f32 0.0, %v325
    %v327 = vpop.f32.mrf.mxu0
    %v328 = vadd.f32 0.0, %v327
    %329 = vmatprep.mubr.f32.mxu0 0.0
    %330 = vmatmul.mubr.f32.gmra.mxu0 %v67
    %v331 = vpop.f32.mrf.mxu0
    %v332 = vadd.f32 0.0, %v331
    %v333 = vpop.f32.mrf.mxu0
    %v334 = vadd.f32 0.0, %v333
    %335 = vdwg.mxu0
    %336 = vmatprep.subr.mxu0 0.0
    %337 = vmatpush1.msra.mxu0 0.0
    %338 = vmatprep.subr.mxu0 0.0
    %339 = vmatpush1.msra.mxu0 0.0
    %340 = vmatprep.subr.mxu0 0.0
    %341 = vmatpush1.msra.mxu0 0.0
    %342 = vmatprep.subr.mxu0 0.0
    %343 = vmatpush1.msra.mxu0 0.0
    %344 = vmatprep.subr.mxu0 0.0
    %345 = vmatpush1.msra.mxu0 0.0
    %346 = vmatprep.subr.mxu0 0.0
    %347 = vmatpush1.msra.mxu0 0.0
    %348 = vmatprep.subr.mxu0 0.0
    %349 = vmatpush1.msra.mxu0 0.0
    %350 = vmatprep.subr.mxu0 0.0
    %351 = vmatpush1.msra.mxu0 0.0
    %352 = vmatprep.subr.mxu0 0.0
    %353 = vmatpush1.msra.mxu0 0.0
    %354 = vmatprep.subr.mxu0 0.0
    %355 = vmatpush1.msra.mxu0 0.0
    %356 = vmatprep.subr.mxu0 0.0
    %357 = vmatpush1.msra.mxu0 0.0
    %358 = vmatprep.subr.mxu0 0.0
    %359 = vmatpush1.msra.mxu0 0.0
    %360 = vmatprep.subr.mxu0 0.0
    %361 = vmatpush1.msra.mxu0 0.0
    %362 = vmatprep.subr.mxu0 %v55
    %363 = vmatpush1.msra.mxu0 %v54
    %364 = vmatprep.subr.mxu0 %v47
    %365 = vmatpush1.msra.mxu0 %v46
    %366 = vmatprep.subr.mxu0 %v39
    %367 = vmatpush1.msra.mxu0 %v38
    %368 = vmatprep.subr.mxu0 0.0
    %369 = vmatpush2.msra.mxu0 0.0
    %370 = vmatprep.subr.mxu0 0.0
    %371 = vmatpush2.msra.mxu0 0.0
    %372 = vmatprep.subr.mxu0 0.0
    %373 = vmatpush2.msra.mxu0 0.0
    %374 = vmatprep.subr.mxu0 0.0
    %375 = vmatpush2.msra.mxu0 0.0
    %376 = vmatprep.subr.mxu0 0.0
    %377 = vmatpush2.msra.mxu0 0.0
    %378 = vmatprep.subr.mxu0 0.0
    %379 = vmatpush2.msra.mxu0 0.0
    %380 = vmatprep.subr.mxu0 0.0
    %381 = vmatpush2.msra.mxu0 0.0
    %382 = vmatprep.subr.mxu0 0.0
    %383 = vmatpush2.msra.mxu0 0.0
    %384 = vmatprep.subr.mxu0 0.0
    %385 = vmatpush2.msra.mxu0 0.0
    %386 = vmatprep.subr.mxu0 0.0
    %387 = vmatpush2.msra.mxu0 0.0
    %388 = vmatprep.subr.mxu0 0.0
    %389 = vmatpush2.msra.mxu0 0.0
    %390 = vmatprep.subr.mxu0 0.0
    %391 = vmatpush2.msra.mxu0 0.0
    %392 = vmatprep.subr.mxu0 0.0
    %393 = vmatpush2.msra.mxu0 0.0
    %394 = vmatprep.subr.mxu0 0.0
    %395 = vmatpush2.msra.mxu0 0.0
    %396 = vmatprep.subr.mxu0 0.0
    %397 = vmatpush2.msra.mxu0 0.0
    %398 = vmatprep.subr.mxu0 0.0
    %399 = vmatpush2.msra.mxu0 0.0
    %400 = vmatprep.mubr.f32.mxu0 0.0
    %401 = vmatmul.mubr.f32.gmra.mxu0 %v58
    %v402 = vpop.f32.mrf.mxu0
    %v403 = vadd.f32 0.0, %v402
    %v404 = vpop.f32.mrf.mxu0
    %v405 = vadd.f32 0.0, %v404
    %406 = vmatprep.mubr.f32.mxu0 0.0
    %407 = vmatmul.mubr.f32.gmra.mxu0 %v61
    %v408 = vpop.f32.mrf.mxu0
    %v409 = vadd.f32 0.0, %v408
    %v410 = vpop.f32.mrf.mxu0
    %v411 = vadd.f32 0.0, %v410
    %412 = vmatprep.mubr.f32.mxu0 0.0
    %413 = vmatmul.mubr.f32.gmra.mxu0 %v64
    %v414 = vpop.f32.mrf.mxu0
    %v415 = vadd.f32 0.0, %v414
    %v416 = vpop.f32.mrf.mxu0
    %v417 = vadd.f32 0.0, %v416
    %418 = vmatprep.mubr.f32.mxu0 0.0
    %419 = vmatmul.mubr.f32.gmra.mxu0 %v67
    %v420 = vpop.f32.mrf.mxu0
    %v421 = vadd.f32 0.0, %v420
    %v422 = vpop.f32.mrf.mxu0
    %v423 = vadd.f32 0.0, %v422
    %424 = vdwg.mxu0
    %425 = vst [vmem:[#allocation2] sm:$0xff] %v136
    %426 = vst [vmem:[#allocation2 + $0x8] sm:$0xff] %v138
    %427 = vst [vmem:[#allocation2 + $0x10] sm:$0xff] %v225
    %428 = vst [vmem:[#allocation2 + $0x18] sm:$0xff] %v227
    %429 = vst [vmem:[#allocation2 + $0x20] sm:$0xff] %v314
    %430 = vst [vmem:[#allocation2 + $0x28] sm:$0xff] %v316
    %431 = vst [vmem:[#allocation2 + $0x30] sm:$0xff] %v403
    %432 = vst [vmem:[#allocation2 + $0x38] sm:$0xff] %v405
    %433 = vst [vmem:[#allocation2 + $0x40] sm:$0xff] %v142
    %434 = vst [vmem:[#allocation2 + $0x48] sm:$0xff] %v144
    %435 = vst [vmem:[#allocation2 + $0x50] sm:$0xff] %v231
    %436 = vst [vmem:[#allocation2 + $0x58] sm:$0xff] %v233
    %437 = vst [vmem:[#allocation2 + $0x60] sm:$0xff] %v320
    %438 = vst [vmem:[#allocation2 + $0x68] sm:$0xff] %v322
    %439 = vst [vmem:[#allocation2 + $0x70] sm:$0xff] %v409
    %440 = vst [vmem:[#allocation2 + $0x78] sm:$0xff] %v411
    %441 = vst [vmem:[#allocation2 + $0x80] sm:$0xff] %v148
    %442 = vst [vmem:[#allocation2 + $0x88] sm:$0xff] %v150
    %443 = vst [vmem:[#allocation2 + $0x90] sm:$0xff] %v237
    %444 = vst [vmem:[#allocation2 + $0x98] sm:$0xff] %v239
    %445 = vst [vmem:[#allocation2 + $0xa0] sm:$0xff] %v326
    %446 = vst [vmem:[#allocation2 + $0xa8] sm:$0xff] %v328
    %447 = vst [vmem:[#allocation2 + $0xb0] sm:$0xff] %v415
    %448 = vst [vmem:[#allocation2 + $0xb8] sm:$0xff] %v417
    %449 = vst [vmem:[#allocation2 + $0xc0] sm:$0xff] %v154
    %450 = vst [vmem:[#allocation2 + $0xc8] sm:$0xff] %v156
    %451 = vst [vmem:[#allocation2 + $0xd0] sm:$0xff] %v243
    %452 = vst [vmem:[#allocation2 + $0xd8] sm:$0xff] %v245
    %453 = vst [vmem:[#allocation2 + $0xe0] sm:$0xff] %v332
    %454 = vst [vmem:[#allocation2 + $0xe8] sm:$0xff] %v334
    %455 = vst [vmem:[#allocation2 + $0xf0] sm:$0xff] %v421
    %456 = vst [vmem:[#allocation2 + $0xf8] sm:$0xff] %v423
    %v457 = vld [vmem:[%s2] sm:$0x1]
    %v458 = vld [vmem:[%s2 + $0x1] sm:$0x1]
    %v459 = vld [vmem:[%s2 + $0x2] sm:$0x1]
    %v460 = vld [vmem:[%s2 + $0x3] sm:$0x1]
    %v461 = vld [vmem:[%s2 + $0x4] sm:$0x1]
    %v462 = vld [vmem:[%s2 + $0x5] sm:$0x1]
    %v463 = vld [vmem:[%s2 + $0x6] sm:$0x1]
    %v464 = vld [vmem:[%s2 + $0x7] sm:$0x1]
    %s465 = smul.u32 0, 8
    %s466 = smul.addr %s465, 8
    %s467 = scalar_lea.vmem [#allocation2], %s466
    %v468 = vld [vmem:[%s467] sm:$0xff]
    %v469 = vld [vmem:[%s467 + $0x40] sm:$0xff]
    %v470 = vld [vmem:[%s467 + $0x80] sm:$0xff]
    %v471 = vld [vmem:[%s467 + $0xc0] sm:$0xff]
    %v472 = vld [vmem:[%s467 + $0x8] sm:$0xff]
    %v473 = vld [vmem:[%s467 + $0x48] sm:$0xff]
    %v474 = vld [vmem:[%s467 + $0x88] sm:$0xff]
    %v475 = vld [vmem:[%s467 + $0xc8] sm:$0xff]
    %v476 = vld [vmem:[%s467 + $0x10] sm:$0xff]
    %v477 = vld [vmem:[%s467 + $0x50] sm:$0xff]
    %v478 = vld [vmem:[%s467 + $0x90] sm:$0xff]
    %v479 = vld [vmem:[%s467 + $0xd0] sm:$0xff]
    %v480 = vld [vmem:[%s467 + $0x18] sm:$0xff]
    %v481 = vld [vmem:[%s467 + $0x58] sm:$0xff]
    %v482 = vld [vmem:[%s467 + $0x98] sm:$0xff]
    %v483 = vld [vmem:[%s467 + $0xd8] sm:$0xff]
    %v484 = vld [vmem:[%s467 + $0x20] sm:$0xff]
    %v485 = vld [vmem:[%s467 + $0x60] sm:$0xff]
    %v486 = vld [vmem:[%s467 + $0xa0] sm:$0xff]
    %v487 = vld [vmem:[%s467 + $0xe0] sm:$0xff]
    %v488 = vld [vmem:[%s467 + $0x28] sm:$0xff]
    %v489 = vld [vmem:[%s467 + $0x68] sm:$0xff]
    %v490 = vld [vmem:[%s467 + $0xa8] sm:$0xff]
    %v491 = vld [vmem:[%s467 + $0xe8] sm:$0xff]
    %v492 = vld [vmem:[%s467 + $0x30] sm:$0xff]
    %v493 = vld [vmem:[%s467 + $0x70] sm:$0xff]
    %v494 = vld [vmem:[%s467 + $0xb0] sm:$0xff]
    %v495 = vld [vmem:[%s467 + $0xf0] sm:$0xff]
    %v496 = vld [vmem:[%s467 + $0x38] sm:$0xff]
    %v497 = vld [vmem:[%s467 + $0x78] sm:$0xff]
    %v498 = vld [vmem:[%s467 + $0xb8] sm:$0xff]
    %v499 = vld [vmem:[%s467 + $0xf8] sm:$0xff]
    %v500 = vmin.f32 %v468, %v484
    %v501 = vmin.f32 %v469, %v485
    %v502 = vmin.f32 %v470, %v486
    %v503 = vmin.f32 %v471, %v487
    %v504 = vmax.f32 %v468, %v484
    %v505 = vmax.f32 %v469, %v485
    %v506 = vmax.f32 %v470, %v486
    %v507 = vmax.f32 %v471, %v487
    %v508 = vmin.f32 %v472, %v488
    %v509 = vmin.f32 %v473, %v489
    %v510 = vmin.f32 %v474, %v490
    %v511 = vmin.f32 %v475, %v491
    %v512 = vmax.f32 %v472, %v488
    %v513 = vmax.f32 %v473, %v489
    %v514 = vmax.f32 %v474, %v490
    %v515 = vmax.f32 %v475, %v491
    %v516 = vmin.f32 %v476, %v492
    %v517 = vmin.f32 %v477, %v493
    %v518 = vmin.f32 %v478, %v494
    %v519 = vmin.f32 %v479, %v495
    %v520 = vmax.f32 %v476, %v492
    %v521 = vmax.f32 %v477, %v493
    %v522 = vmax.f32 %v478, %v494
    %v523 = vmax.f32 %v479, %v495
    %v524 = vmin.f32 %v480, %v496
    %v525 = vmin.f32 %v481, %v497
    %v526 = vmin.f32 %v482, %v498
    %v527 = vmin.f32 %v483, %v499
    %v528 = vmax.f32 %v480, %v496
    %v529 = vmax.f32 %v481, %v497
    %v530 = vmax.f32 %v482, %v498
    %v531 = vmax.f32 %v483, %v499
    %v532 = vmin.f32 %v500, %v516
    %v533 = vmin.f32 %v501, %v517
    %v534 = vmin.f32 %v502, %v518
    %v535 = vmin.f32 %v503, %v519
    %v536 = vmax.f32 %v500, %v516
    %v537 = vmax.f32 %v501, %v517
    %v538 = vmax.f32 %v502, %v518
    %v539 = vmax.f32 %v503, %v519
    %v540 = vmin.f32 %v508, %v524
    %v541 = vmin.f32 %v509, %v525
    %v542 = vmin.f32 %v510, %v526
    %v543 = vmin.f32 %v511, %v527
    %v544 = vmax.f32 %v508, %v524
    %v545 = vmax.f32 %v509, %v525
    %v546 = vmax.f32 %v510, %v526
    %v547 = vmax.f32 %v511, %v527
    %v548 = vmin.f32 %v504, %v520
    %v549 = vmin.f32 %v505, %v521
    %v550 = vmin.f32 %v506, %v522
    %v551 = vmin.f32 %v507, %v523
    %v552 = vmax.f32 %v504, %v520
    %v553 = vmax.f32 %v505, %v521
    %v554 = vmax.f32 %v506, %v522
    %v555 = vmax.f32 %v507, %v523
    %v556 = vmin.f32 %v512, %v528
    %v557 = vmin.f32 %v513, %v529
    %v558 = vmin.f32 %v514, %v530
    %v559 = vmin.f32 %v515, %v531
    %v560 = vmax.f32 %v512, %v528
    %v561 = vmax.f32 %v513, %v529
    %v562 = vmax.f32 %v514, %v530
    %v563 = vmax.f32 %v515, %v531
    %v564 = vmin.f32 %v536, %v548
    %v565 = vmin.f32 %v537, %v549
    %v566 = vmin.f32 %v538, %v550
    %v567 = vmin.f32 %v539, %v551
    %v568 = vmax.f32 %v536, %v548
    %v569 = vmax.f32 %v537, %v549
    %v570 = vmax.f32 %v538, %v550
    %v571 = vmax.f32 %v539, %v551
    %v572 = vmin.f32 %v544, %v556
    %v573 = vmin.f32 %v545, %v557
    %v574 = vmin.f32 %v546, %v558
    %v575 = vmin.f32 %v547, %v559
    %v576 = vmax.f32 %v544, %v556
    %v577 = vmax.f32 %v545, %v557
    %v578 = vmax.f32 %v546, %v558
    %v579 = vmax.f32 %v547, %v559
    %v580 = vmin.f32 %v532, %v540
    %v581 = vmin.f32 %v533, %v541
    %v582 = vmin.f32 %v534, %v542
    %v583 = vmin.f32 %v535, %v543
    %v584 = vmax.f32 %v532, %v540
    %v585 = vmax.f32 %v533, %v541
    %v586 = vmax.f32 %v534, %v542
    %v587 = vmax.f32 %v535, %v543
    %v588 = vmin.f32 %v564, %v572
    %v589 = vmin.f32 %v565, %v573
    %v590 = vmin.f32 %v566, %v574
    %v591 = vmin.f32 %v567, %v575
    %v592 = vmax.f32 %v564, %v572
    %v593 = vmax.f32 %v565, %v573
    %v594 = vmax.f32 %v566, %v574
    %v595 = vmax.f32 %v567, %v575
    %v596 = vmin.f32 %v568, %v576
    %v597 = vmin.f32 %v569, %v577
    %v598 = vmin.f32 %v570, %v578
    %v599 = vmin.f32 %v571, %v579
    %v600 = vmax.f32 %v568, %v576
    %v601 = vmax.f32 %v569, %v577
    %v602 = vmax.f32 %v570, %v578
    %v603 = vmax.f32 %v571, %v579
    %v604 = vmin.f32 %v552, %v560
    %v605 = vmin.f32 %v553, %v561
    %v606 = vmin.f32 %v554, %v562
    %v607 = vmin.f32 %v555, %v563
    %v608 = vmax.f32 %v552, %v560
    %v609 = vmax.f32 %v553, %v561
    %v610 = vmax.f32 %v554, %v562
    %v611 = vmax.f32 %v555, %v563
    %v612 = vmin.f32 %v584, %v596
    %v613 = vmin.f32 %v585, %v597
    %v614 = vmin.f32 %v586, %v598
    %v615 = vmin.f32 %v587, %v599
    %v616 = vmax.f32 %v584, %v596
    %v617 = vmax.f32 %v585, %v597
    %v618 = vmax.f32 %v586, %v598
    %v619 = vmax.f32 %v587, %v599
    %v620 = vmin.f32 %v592, %v604
    %v621 = vmin.f32 %v593, %v605
    %v622 = vmin.f32 %v594, %v606
    %v623 = vmin.f32 %v595, %v607
    %v624 = vmax.f32 %v592, %v604
    %v625 = vmax.f32 %v593, %v605
    %v626 = vmax.f32 %v594, %v606
    %v627 = vmax.f32 %v595, %v607
    %v628 = vmin.f32 %v612, %v588
    %v629 = vmin.f32 %v613, %v589
    %v630 = vmin.f32 %v614, %v590
    %v631 = vmin.f32 %v615, %v591
    %v632 = vmax.f32 %v612, %v588
    %v633 = vmax.f32 %v613, %v589
    %v634 = vmax.f32 %v614, %v590
    %v635 = vmax.f32 %v615, %v591
    %v636 = vmin.f32 %v620, %v616
    %v637 = vmin.f32 %v621, %v617
    %v638 = vmin.f32 %v622, %v618
    %v639 = vmin.f32 %v623, %v619
    %v640 = vmax.f32 %v620, %v616
    %v641 = vmax.f32 %v621, %v617
    %v642 = vmax.f32 %v622, %v618
    %v643 = vmax.f32 %v623, %v619
    %v644 = vmin.f32 %v600, %v624
    %v645 = vmin.f32 %v601, %v625
    %v646 = vmin.f32 %v602, %v626
    %v647 = vmin.f32 %v603, %v627
    %v648 = vmax.f32 %v600, %v624
    %v649 = vmax.f32 %v601, %v625
    %v650 = vmax.f32 %v602, %v626
    %v651 = vmax.f32 %v603, %v627
    %v653 = vlaneseq
    %v654 = vshrl.u32 %v653, 7
    %v655 = vsub.s32 0, %v654
    %v656 = vrot.slane %v457, %v655
    %v658 = vmul.f32 %v580, %v656
    %v659 = vmul.f32 %v581, %v656
    %v660 = vmul.f32 %v582, %v656
    %v661 = vmul.f32 %v583, %v656
    %v663 = vlaneseq
    %v664 = vshrl.u32 %v663, 7
    %v665 = vsub.s32 0, %v664
    %v666 = vrot.slane %v458, %v665
    %v668 = vmul.f32 %v628, %v666
    %v669 = vmul.f32 %v629, %v666
    %v670 = vmul.f32 %v630, %v666
    %v671 = vmul.f32 %v631, %v666
    %v673 = vlaneseq
    %v674 = vshrl.u32 %v673, 7
    %v675 = vsub.s32 0, %v674
    %v676 = vrot.slane %v459, %v675
    %v678 = vmul.f32 %v632, %v676
    %v679 = vmul.f32 %v633, %v676
    %v680 = vmul.f32 %v634, %v676
    %v681 = vmul.f32 %v635, %v676
    %v683 = vlaneseq
    %v684 = vshrl.u32 %v683, 7
    %v685 = vsub.s32 0, %v684
    %v686 = vrot.slane %v460, %v685
    %v688 = vmul.f32 %v636, %v686
    %v689 = vmul.f32 %v637, %v686
    %v690 = vmul.f32 %v638, %v686
    %v691 = vmul.f32 %v639, %v686
    %v693 = vlaneseq
    %v694 = vshrl.u32 %v693, 7
    %v695 = vsub.s32 0, %v694
    %v696 = vrot.slane %v461, %v695
    %v698 = vmul.f32 %v640, %v696
    %v699 = vmul.f32 %v641, %v696
    %v700 = vmul.f32 %v642, %v696
    %v701 = vmul.f32 %v643, %v696
    %v703 = vlaneseq
    %v704 = vshrl.u32 %v703, 7
    %v705 = vsub.s32 0, %v704
    %v706 = vrot.slane %v462, %v705
    %v708 = vmul.f32 %v644, %v706
    %v709 = vmul.f32 %v645, %v706
    %v710 = vmul.f32 %v646, %v706
    %v711 = vmul.f32 %v647, %v706
    %v713 = vlaneseq
    %v714 = vshrl.u32 %v713, 7
    %v715 = vsub.s32 0, %v714
    %v716 = vrot.slane %v463, %v715
    %v718 = vmul.f32 %v648, %v716
    %v719 = vmul.f32 %v649, %v716
    %v720 = vmul.f32 %v650, %v716
    %v721 = vmul.f32 %v651, %v716
    %v723 = vlaneseq
    %v724 = vshrl.u32 %v723, 7
    %v725 = vsub.s32 0, %v724
    %v726 = vrot.slane %v464, %v725
    %v728 = vmul.f32 %v608, %v726
    %v729 = vmul.f32 %v609, %v726
    %v730 = vmul.f32 %v610, %v726
    %v731 = vmul.f32 %v611, %v726
    %v732 = vadd.f32 %v658, %v668
    %v733 = vadd.f32 %v659, %v669
    %v734 = vadd.f32 %v660, %v670
    %v735 = vadd.f32 %v661, %v671
    %v736 = vadd.f32 %v678, %v688
    %v737 = vadd.f32 %v679, %v689
    %v738 = vadd.f32 %v680, %v690
    %v739 = vadd.f32 %v681, %v691
    %v740 = vadd.f32 %v698, %v708
    %v741 = vadd.f32 %v699, %v709
    %v742 = vadd.f32 %v700, %v710
    %v743 = vadd.f32 %v701, %v711
    %v744 = vadd.f32 %v718, %v728
    %v745 = vadd.f32 %v719, %v729
    %v746 = vadd.f32 %v720, %v730
    %v747 = vadd.f32 %v721, %v731
    %v748 = vadd.f32 %v732, %v736
    %v749 = vadd.f32 %v733, %v737
    %v750 = vadd.f32 %v734, %v738
    %v751 = vadd.f32 %v735, %v739
    %v752 = vadd.f32 %v740, %v744
    %v753 = vadd.f32 %v741, %v745
    %v754 = vadd.f32 %v742, %v746
    %v755 = vadd.f32 %v743, %v747
    %v756 = vadd.f32 %v748, %v752
    %v757 = vadd.f32 %v749, %v753
    %v758 = vadd.f32 %v750, %v754
    %v759 = vadd.f32 %v751, %v755
    %760 = vst [vmem:[%s3] sm:$0xff] %v756
    %761 = vst [vmem:[%s3 + $0x8] sm:$0xff] %v757
    %762 = vst [vmem:[%s3 + $0x10] sm:$0xff] %v758
    %763 = vst [vmem:[%s3 + $0x18] sm:$0xff] %v759
    // Predicated region
    $region18: #{forward.1} parent=1 // pred_check
      _
    $region19: #{forward.1} parent=1 // pred_check_branch
      %765 = sbr.rel (0) target = $region21
    $region20: #{forward.1} parent=1 // pred_region
      _
    $region21: #{forward.1} parent=1 // pred_fallthru
      _
    // Predicated region
    $region22: #{forward.1} parent=1 // pred_check
      _
    $region23: #{forward.1} parent=1 // pred_check_branch
      %767 = sbr.rel (0) target = $region25
    $region24: #{forward.1} parent=1 // pred_region
      _
    $region25: #{forward.1} parent=1 // pred_fallthru
      _
    %768 = vsyncpa [#allocation4], 1

</llo_original>
